<compile_context>
chip_gen: v7x
topology: tpu7x:2x2x1
jax: 0.10.0
libtpu: 0.0.40
codegen_flags: <defaults>
</compile_context>

<pallas_src>
import functools

import jax
import jax.numpy as jnp
from jax.experimental import pallas as pl
from jax.experimental.pallas import tpu as pltpu


def mlp_kernel(x_ref, w1_ref, b1_ref, w2_ref, b2_ref, w3_ref, b3_ref, o_ref):
    # fc1 + relu1
    h = jnp.dot(x_ref[...], w1_ref[...], preferred_element_type=jnp.float32)
    h = jnp.maximum(h + b1_ref[...], 0.0)
    # fc2 + relu2
    h = jnp.dot(h, w2_ref[...], preferred_element_type=jnp.float32)
    h = jnp.maximum(h + b2_ref[...], 0.0)
    # fc3 (no activation); output is lane-dense (padded to a multiple of 128)
    h = jnp.dot(h, w3_ref[...], preferred_element_type=jnp.float32)
    o_ref[...] = (h + b3_ref[...]).astype(o_ref.dtype)


def _round_up(n, m):
    return ((n + m - 1) // m) * m


@functools.partial(jax.jit, static_argnames=("block_b",))
def net_forward(x, w1, b1, w2, b2, w3, b3, *, block_b=None):
    B, in_dim = x.shape
    hid = w1.shape[1]
    out_dim = w3.shape[1]

    # ---- Lane-dense output: pad the last matmul's output dim to 128 lanes ----
    out_pad = _round_up(out_dim, 128)
    if out_pad != out_dim:
        w3p = jnp.pad(w3, ((0, 0), (0, out_pad - out_dim)))
        b3p = jnp.pad(b3, ((0, 0), (0, out_pad - out_dim)))
    else:
        w3p, b3p = w3, b3

    # ---- Batch tiling: one grid step for small B, big tiles for large B ----
    if block_b is None:
        block_b = min(_round_up(B, 8), 512)
    B_pad = _round_up(B, block_b)
    if B_pad != B:
        x = jnp.pad(x, ((0, B_pad - B), (0, 0)))

    grid = (B_pad // block_b,)

    # Weights/biases are tiny (<~70 KiB even padded) and block-index-invariant,
    # so they stay resident in VMEM; only the x / output tiles stream.
    full = lambda shape: pl.BlockSpec(shape, lambda i: (0, 0))

    out = pl.pallas_call(
        mlp_kernel,
        out_shape=jax.ShapeDtypeStruct((B_pad, out_pad), jnp.float32),
        grid_spec=pltpu.PrefetchScalarGridSpec(
            num_scalar_prefetch=0,
            grid=grid,
            in_specs=[
                pl.BlockSpec((block_b, in_dim), lambda i: (i, 0)),  # x tile
                full((in_dim, hid)),    # w1
                full((1, hid)),         # b1
                full((hid, hid)),       # w2
                full((1, hid)),         # b2
                full((hid, out_pad)),   # w3 (lane-padded)
                full((1, out_pad)),     # b3 (lane-padded)
            ],
            out_specs=pl.BlockSpec((block_b, out_pad), lambda i: (i, 0)),
        ),
        compiler_params=pltpu.CompilerParams(
            dimension_semantics=("parallel",) if grid[0] > 1 else ("arbitrary",)
        ),
    )(x, w1, b1, w2, b2, w3p, b3p)

    # Strip batch / lane padding.
    return out[:B, :out_dim]


def init_linear(key, in_f, out_f):
    """PyTorch-style nn.Linear init: U(-1/sqrt(in_f), 1/sqrt(in_f))."""
    kw, kb = jax.random.split(key)
    bound = 1.0 / jnp.sqrt(jnp.float32(in_f))
    # Stored as (in_f, out_f) so forward is x @ W + b.
    w = jax.random.uniform(kw, (in_f, out_f), jnp.float32, -bound, bound)
    b = jax.random.uniform(kb, (1, out_f), jnp.float32, -bound, bound)
    return w, b


def reference_forward(x, w1, b1, w2, b2, w3, b3):
    h = jnp.maximum(x @ w1 + b1, 0.0)
    h = jnp.maximum(h @ w2 + b2, 0.0)
    return h @ w3 + b3


if __name__ == "__main__":
    input_size = 32
    output_size = 8
    batch = 16
    hidden = 16  # fixed by the module definition (fc1/fc2 -> 16)

    key = jax.random.PRNGKey(0)
    kx, k1, k2, k3 = jax.random.split(key, 4)

    x = jax.random.normal(kx, (batch, input_size), jnp.float32)
    w1, b1 = init_linear(k1, input_size, hidden)
    w2, b2 = init_linear(k2, hidden, hidden)
    w3, b3 = init_linear(k3, hidden, output_size)

    out = net_forward(x, w1, b1, w2, b2, w3, b3)
    out = jax.block_until_ready(out)

    ref = reference_forward(x, w1, b1, w2, b2, w3, b3)
    assert out.shape == (batch, output_size)
    assert jnp.allclose(out, ref, atol=1e-5, rtol=1e-5)

    print("KERNEL_OK")
</pallas_src>

<mosaic_0001>
module attributes {stable_mosaic.version = 11 : i64} {
  func.func @mlp_kernel(%arg0: i32, %arg1: memref<16x32xf32, #tpu.memory_space<vmem>>, %arg2: memref<32x16xf32, #tpu.memory_space<vmem>>, %arg3: memref<1x16xf32, #tpu.memory_space<vmem>>, %arg4: memref<16x16xf32, #tpu.memory_space<vmem>>, %arg5: memref<1x16xf32, #tpu.memory_space<vmem>>, %arg6: memref<16x128xf32, #tpu.memory_space<vmem>>, %arg7: memref<1x128xf32, #tpu.memory_space<vmem>>, %arg8: memref<16x128xf32, #tpu.memory_space<vmem>>) attributes {dimension_semantics = [#tpu.dimension_semantics<arbitrary>], iteration_bounds = array<i64: 1>, scalar_prefetch = 0 : i64, scratch_operands = 0 : i64, tpu.core_type = #tpu.core_type<tc>, window_params = [{transform_indices = @transform_0, window_bounds = array<i64: 16, 32>}, {pipeline_mode = #tpu.pipeline_mode<synchronous>, transform_indices = @transform_1, window_bounds = array<i64: 32, 16>}, {pipeline_mode = #tpu.pipeline_mode<synchronous>, transform_indices = @transform_2, window_bounds = array<i64: 1, 16>}, {pipeline_mode = #tpu.pipeline_mode<synchronous>, transform_indices = @transform_3, window_bounds = array<i64: 16, 16>}, {pipeline_mode = #tpu.pipeline_mode<synchronous>, transform_indices = @transform_4, window_bounds = array<i64: 1, 16>}, {pipeline_mode = #tpu.pipeline_mode<synchronous>, transform_indices = @transform_5, window_bounds = array<i64: 16, 128>}, {pipeline_mode = #tpu.pipeline_mode<synchronous>, transform_indices = @transform_6, window_bounds = array<i64: 1, 128>}, {transform_indices = @transform_7, window_bounds = array<i64: 16, 128>}]} {
    %c0 = arith.constant 0 : index
    %c0_0 = arith.constant 0 : index
    %0 = vector.load %arg1[%c0, %c0_0] : memref<16x32xf32, #tpu.memory_space<vmem>>, vector<16x32xf32>
    %c0_1 = arith.constant 0 : index
    %c0_2 = arith.constant 0 : index
    %1 = vector.load %arg2[%c0_1, %c0_2] : memref<32x16xf32, #tpu.memory_space<vmem>>, vector<32x16xf32>
    %cst = arith.constant dense<0.000000e+00> : vector<16x16xf32>
    %2 = tpu.matmul %0, %1, %cst {dimension_numbers = #tpu.dot_dimension_numbers<[1], [0], [0], [1], [0, 0, 1, 1], [], []>} : vector<16x32xf32>, vector<32x16xf32>, vector<16x16xf32> -> vector<16x16xf32>
    %c0_3 = arith.constant 0 : index
    %c0_4 = arith.constant 0 : index
    %3 = vector.load %arg3[%c0_3, %c0_4] : memref<1x16xf32, #tpu.memory_space<vmem>>, vector<1x16xf32>
    %4 = vector.broadcast %3 : vector<1x16xf32> to vector<16x16xf32>
    %5 = arith.addf %2, %4 : vector<16x16xf32>
    %cst_5 = arith.constant 0.000000e+00 : f32
    %6 = vector.broadcast %cst_5 : f32 to vector<16x16xf32>
    %7 = arith.maximumf %5, %6 : vector<16x16xf32>
    %c0_6 = arith.constant 0 : index
    %c0_7 = arith.constant 0 : index
    %8 = vector.load %arg4[%c0_6, %c0_7] : memref<16x16xf32, #tpu.memory_space<vmem>>, vector<16x16xf32>
    %cst_8 = arith.constant dense<0.000000e+00> : vector<16x16xf32>
    %9 = tpu.matmul %7, %8, %cst_8 {dimension_numbers = #tpu.dot_dimension_numbers<[1], [0], [0], [1], [0, 0, 1, 1], [], []>} : vector<16x16xf32>, vector<16x16xf32>, vector<16x16xf32> -> vector<16x16xf32>
    %c0_9 = arith.constant 0 : index
    %c0_10 = arith.constant 0 : index
    %10 = vector.load %arg5[%c0_9, %c0_10] : memref<1x16xf32, #tpu.memory_space<vmem>>, vector<1x16xf32>
    %11 = vector.broadcast %10 : vector<1x16xf32> to vector<16x16xf32>
    %12 = arith.addf %9, %11 : vector<16x16xf32>
    %cst_11 = arith.constant 0.000000e+00 : f32
    %13 = vector.broadcast %cst_11 : f32 to vector<16x16xf32>
    %14 = arith.maximumf %12, %13 : vector<16x16xf32>
    %c0_12 = arith.constant 0 : index
    %c0_13 = arith.constant 0 : index
    %15 = vector.load %arg6[%c0_12, %c0_13] : memref<16x128xf32, #tpu.memory_space<vmem>>, vector<16x128xf32>
    %cst_14 = arith.constant dense<0.000000e+00> : vector<16x128xf32>
    %16 = tpu.matmul %14, %15, %cst_14 {dimension_numbers = #tpu.dot_dimension_numbers<[1], [0], [0], [1], [0, 0, 1, 1], [], []>} : vector<16x16xf32>, vector<16x128xf32>, vector<16x128xf32> -> vector<16x128xf32>
    %c0_15 = arith.constant 0 : index
    %c0_16 = arith.constant 0 : index
    %17 = vector.load %arg7[%c0_15, %c0_16] : memref<1x128xf32, #tpu.memory_space<vmem>>, vector<1x128xf32>
    %18 = vector.broadcast %17 : vector<1x128xf32> to vector<16x128xf32>
    %19 = arith.addf %16, %18 : vector<16x128xf32>
    %c0_17 = arith.constant 0 : index
    %c0_18 = arith.constant 0 : index
    %20 = vector.load %arg8[%c0_17, %c0_18] : memref<16x128xf32, #tpu.memory_space<vmem>>, vector<16x128xf32>
    tpu.vector_store %arg8[%c0_17, %c0_18], %19 {strides = array<i32>} : memref<16x128xf32, #tpu.memory_space<vmem>>, vector<16x128xf32>,
    return
  }
  func.func @transform_0(%arg0: i32) -> (i32, i32) {
    %c0_i32 = arith.constant 0 : i32
    %c0_i32_0 = arith.constant 0 : i32
    return %arg0, %c0_i32 : i32, i32
  }
  func.func @transform_1(%arg0: i32) -> (i32, i32) {
    %c0_i32 = arith.constant 0 : i32
    %c0_i32_0 = arith.constant 0 : i32
    %c0_i32_1 = arith.constant 0 : i32
    return %c0_i32, %c0_i32_0 : i32, i32
  }
  func.func @transform_2(%arg0: i32) -> (i32, i32) {
    %c0_i32 = arith.constant 0 : i32
    %c0_i32_0 = arith.constant 0 : i32
    %c0_i32_1 = arith.constant 0 : i32
    return %c0_i32, %c0_i32_0 : i32, i32
  }
  func.func @transform_3(%arg0: i32) -> (i32, i32) {
    %c0_i32 = arith.constant 0 : i32
    %c0_i32_0 = arith.constant 0 : i32
    %c0_i32_1 = arith.constant 0 : i32
    return %c0_i32, %c0_i32_0 : i32, i32
  }
  func.func @transform_4(%arg0: i32) -> (i32, i32) {
    %c0_i32 = arith.constant 0 : i32
    %c0_i32_0 = arith.constant 0 : i32
    %c0_i32_1 = arith.constant 0 : i32
    return %c0_i32, %c0_i32_0 : i32, i32
  }
  func.func @transform_5(%arg0: i32) -> (i32, i32) {
    %c0_i32 = arith.constant 0 : i32
    %c0_i32_0 = arith.constant 0 : i32
    %c0_i32_1 = arith.constant 0 : i32
    return %c0_i32, %c0_i32_0 : i32, i32
  }
  func.func @transform_6(%arg0: i32) -> (i32, i32) {
    %c0_i32 = arith.constant 0 : i32
    %c0_i32_0 = arith.constant 0 : i32
    %c0_i32_1 = arith.constant 0 : i32
    return %c0_i32, %c0_i32_0 : i32, i32
  }
  func.func @transform_7(%arg0: i32) -> (i32, i32) {
    %c0_i32 = arith.constant 0 : i32
    %c0_i32_0 = arith.constant 0 : i32
    return %arg0, %c0_i32 : i32, i32
  }
}

</mosaic_0001>

<llo_original>
// kernel: net_forward.1
$region0: #{net_forward.1}
  #allocation0 [shape = 'u32[]', space=smem, size = 0x4, offset = 0x4, fixed_abs, tag = 'smem constant byte address 0x4 - core index']
  #allocation1 [shape = 'u32[144,128]{1,0:T(1,128)}', space=vmem, size = 0x12000, scoped, tag = 'internal scratch']
  %s0 = inlined_call_operand.vmem [shape: f32[16,32], index: 0, kind: input, shape index: {}]
  %s1 = inlined_call_operand.vmem [shape: f32[32,16], index: 1, kind: input, shape index: {}]
  %s2 = inlined_call_operand.vmem [shape: f32[1,16], index: 2, kind: input, shape index: {}]
  %s3 = inlined_call_operand.vmem [shape: f32[16,16], index: 3, kind: input, shape index: {}]
  %s4 = inlined_call_operand.vmem [shape: f32[1,16], index: 4, kind: input, shape index: {}]
  %s5 = inlined_call_operand.vmem [shape: f32[16,128], index: 5, kind: input, shape index: {}]
  %s6 = inlined_call_operand.vmem [shape: f32[1,128], index: 6, kind: input, shape index: {}]
  %s7 = inlined_call_operand.vmem [shape: f32[16,128], index: 7, kind: output, shape index: {}]
  %s8 = sld [smem:[#allocation0]]
  $region38: #{net_forward.1} parent=0
    _
  %s10 = ssub.s32 1, %s8
  %s11 = scalar_select 0, %s10, %s8
  // Predicated region
  $region2: #{net_forward.1} parent=0 // pred_check
    _
  $region3: #{net_forward.1} parent=0 // pred_check_branch
    %13 = sbr.rel (0) target = $region5
  $region4: #{net_forward.1} parent=0 // pred_region
    _
  $region5: #{net_forward.1} parent=0 // pred_fallthru
    _
  // Predicated region
  $region6: #{net_forward.1} parent=0 // pred_check
    _
  $region7: #{net_forward.1} parent=0 // pred_check_branch
    %15 = sbr.rel (0) target = $region9
  $region8: #{net_forward.1} parent=0 // pred_region
    _
  $region9: #{net_forward.1} parent=0 // pred_fallthru
    _
  // Predicated region
  $region10: #{net_forward.1} parent=0 // pred_check
    _
  $region11: #{net_forward.1} parent=0 // pred_check_branch
    %17 = sbr.rel (0) target = $region13
  $region12: #{net_forward.1} parent=0 // pred_region
    _
  $region13: #{net_forward.1} parent=0 // pred_fallthru
    _
  // Predicated region
  $region14: #{net_forward.1} parent=0 // pred_check
    _
  $region15: #{net_forward.1} parent=0 // pred_check_branch
    %19 = sbr.rel (0) target = $region17
  $region16: #{net_forward.1} parent=0 // pred_region
    _
  $region17: #{net_forward.1} parent=0 // pred_fallthru
    _
  // Predicated region
  $region18: #{net_forward.1} parent=0 // pred_check
    _
  $region19: #{net_forward.1} parent=0 // pred_check_branch
    %21 = sbr.rel (0) target = $region21
  $region20: #{net_forward.1} parent=0 // pred_region
    _
  $region21: #{net_forward.1} parent=0 // pred_fallthru
    _
  // Predicated region
  $region22: #{net_forward.1} parent=0 // pred_check
    _
  $region23: #{net_forward.1} parent=0 // pred_check_branch
    %23 = sbr.rel (0) target = $region25
  $region24: #{net_forward.1} parent=0 // pred_region
    _
  $region25: #{net_forward.1} parent=0 // pred_fallthru
    _
  // Predicated region
  $region26: #{net_forward.1} parent=0 // pred_check
    _
  $region27: #{net_forward.1} parent=0 // pred_check_branch
    %25 = sbr.rel (0) target = $region29
  $region28: #{net_forward.1} parent=0 // pred_region
    _
  $region29: #{net_forward.1} parent=0 // pred_fallthru
    _
  %v26 = vld [vmem:[%s0] sm:$0xff]
  %v27 = vld [vmem:[%s0 + $0x8] sm:$0xff]
  %v28 = vld [vmem:[%s1] sm:$0xff]
  %v29 = vld [vmem:[%s1 + $0x8] sm:$0xff]
  %v30 = vld [vmem:[%s1 + $0x10] sm:$0xff]
  %v31 = vld [vmem:[%s1 + $0x18] sm:$0xff]
  %v32 = vld [vmem:[%s2] sm:$0x1]
  %v34 = vlaneseq
  %v35 = vshrl.u32 %v34, 7
  %v36 = vsub.s32 0, %v35
  %v37 = vrot.slane %v32, %v36
  %vm39 = vcmask 261120
  %v41 = vsel %vm39, %v26, 0
  %v44 = vsel %vm39, %v27, 0
  %46 = vmatprep.subr.mxu0 0.0
  %47 = vmatpush1.msra.mxu0 %v28
  %48 = vmatprep.subr.mxu0 0.0
  %49 = vmatpush1.msra.mxu0 %v29
  %50 = vmatprep.subr.mxu0 0.0
  %51 = vmatpush1.msra.mxu0 %v30
  %52 = vmatprep.subr.mxu0 0.0
  %53 = vmatpush1.msra.mxu0 %v31
  %54 = vmatprep.subr.mxu0 0.0
  %55 = vmatpush1.msra.mxu0 0.0
  %56 = vmatprep.subr.mxu0 0.0
  %57 = vmatpush1.msra.mxu0 0.0
  %58 = vmatprep.subr.mxu0 0.0
  %59 = vmatpush1.msra.mxu0 0.0
  %60 = vmatprep.subr.mxu0 0.0
  %61 = vmatpush1.msra.mxu0 0.0
  %62 = vmatprep.subr.mxu0 0.0
  %63 = vmatpush1.msra.mxu0 0.0
  %64 = vmatprep.subr.mxu0 0.0
  %65 = vmatpush1.msra.mxu0 0.0
  %66 = vmatprep.subr.mxu0 0.0
  %67 = vmatpush1.msra.mxu0 0.0
  %68 = vmatprep.subr.mxu0 0.0
  %69 = vmatpush1.msra.mxu0 0.0
  %70 = vmatprep.subr.mxu0 0.0
  %71 = vmatpush1.msra.mxu0 0.0
  %72 = vmatprep.subr.mxu0 0.0
  %73 = vmatpush1.msra.mxu0 0.0
  %74 = vmatprep.subr.mxu0 0.0
  %75 = vmatpush1.msra.mxu0 0.0
  %76 = vmatprep.subr.mxu0 0.0
  %77 = vmatpush1.msra.mxu0 0.0
  %78 = vmatprep.subr.mxu0 0.0
  %79 = vmatpush1.msra.mxu0 0.0
  %80 = vmatprep.subr.mxu0 0.0
  %81 = vmatpush1.msra.mxu0 0.0
  %82 = vmatprep.subr.mxu0 0.0
  %83 = vmatpush1.msra.mxu0 0.0
  %84 = vmatprep.subr.mxu0 0.0
  %85 = vmatpush1.msra.mxu0 0.0
  %86 = vmatprep.subr.mxu0 0.0
  %87 = vmatpush1.msra.mxu0 0.0
  %88 = vmatprep.subr.mxu0 0.0
  %89 = vmatpush1.msra.mxu0 0.0
  %90 = vmatprep.subr.mxu0 0.0
  %91 = vmatpush1.msra.mxu0 0.0
  %92 = vmatprep.subr.mxu0 0.0
  %93 = vmatpush1.msra.mxu0 0.0
  %94 = vmatprep.subr.mxu0 0.0
  %95 = vmatpush1.msra.mxu0 0.0
  %96 = vmatprep.subr.mxu0 0.0
  %97 = vmatpush1.msra.mxu0 0.0
  %98 = vmatprep.subr.mxu0 0.0
  %99 = vmatpush1.msra.mxu0 0.0
  %100 = vmatprep.subr.mxu0 0.0
  %101 = vmatpush1.msra.mxu0 0.0
  %102 = vmatprep.subr.mxu0 0.0
  %103 = vmatpush1.msra.mxu0 0.0
  %104 = vmatprep.subr.mxu0 0.0
  %105 = vmatpush1.msra.mxu0 0.0
  %106 = vmatprep.subr.mxu0 0.0
  %107 = vmatpush1.msra.mxu0 0.0
  %108 = vmatprep.subr.mxu0 0.0
  %109 = vmatpush1.msra.mxu0 0.0
  %110 = vmatprep.mubr.f32.mxu0 0.0
  %111 = vmatmul.mubr.f32.gmra.mrb[0].mxu0 %v41
  %v112 = vpop.f32.mrb[0].mxu0
  %v113 = vadd.f32 %v37, %v112
  %v114 = vpop.f32.mrb[0].mxu0
  %115 = vmatprep.mubr.f32.mxu0 0.0
  %116 = vmatmul.mubr.f32.gmra.mrb[0].mxu0 %v44
  %v117 = vpop.f32.mrb[0].mxu0
  %v118 = vadd.f32 %v37, %v117
  %v119 = vpop.f32.mrb[0].mxu0
  %120 = vdwg.mxu0
  %v121 = vmax.f32 %v113, 0.0
  %v122 = vmax.f32 %v118, 0.0
  %v123 = vld [vmem:[%s3] sm:$0xff]
  %v124 = vld [vmem:[%s3 + $0x8] sm:$0xff]
  %v125 = vld [vmem:[%s4] sm:$0x1]
  %v127 = vlaneseq
  %v128 = vshrl.u32 %v127, 7
  %v129 = vsub.s32 0, %v128
  %v130 = vrot.slane %v125, %v129
  %vm132 = vcmask 130048
  %v134 = vsel %vm132, %v121, 0
  %v137 = vsel %vm132, %v122, 0
  %139 = vmatprep.subr.mxu0 0.0
  %140 = vmatpush1.msra.mxu0 %v123
  %141 = vmatprep.subr.mxu0 0.0
  %142 = vmatpush1.msra.mxu0 %v124
  %143 = vmatprep.subr.mxu0 0.0
  %144 = vmatpush1.msra.mxu0 0.0
  %145 = vmatprep.subr.mxu0 0.0
  %146 = vmatpush1.msra.mxu0 0.0
  %147 = vmatprep.subr.mxu0 0.0
  %148 = vmatpush1.msra.mxu0 0.0
  %149 = vmatprep.subr.mxu0 0.0
  %150 = vmatpush1.msra.mxu0 0.0
  %151 = vmatprep.subr.mxu0 0.0
  %152 = vmatpush1.msra.mxu0 0.0
  %153 = vmatprep.subr.mxu0 0.0
  %154 = vmatpush1.msra.mxu0 0.0
  %155 = vmatprep.subr.mxu0 0.0
  %156 = vmatpush1.msra.mxu0 0.0
  %157 = vmatprep.subr.mxu0 0.0
  %158 = vmatpush1.msra.mxu0 0.0
  %159 = vmatprep.subr.mxu0 0.0
  %160 = vmatpush1.msra.mxu0 0.0
  %161 = vmatprep.subr.mxu0 0.0
  %162 = vmatpush1.msra.mxu0 0.0
  %163 = vmatprep.subr.mxu0 0.0
  %164 = vmatpush1.msra.mxu0 0.0
  %165 = vmatprep.subr.mxu0 0.0
  %166 = vmatpush1.msra.mxu0 0.0
  %167 = vmatprep.subr.mxu0 0.0
  %168 = vmatpush1.msra.mxu0 0.0
  %169 = vmatprep.subr.mxu0 0.0
  %170 = vmatpush1.msra.mxu0 0.0
  %171 = vmatprep.subr.mxu0 0.0
  %172 = vmatpush1.msra.mxu0 0.0
  %173 = vmatprep.subr.mxu0 0.0
  %174 = vmatpush1.msra.mxu0 0.0
  %175 = vmatprep.subr.mxu0 0.0
  %176 = vmatpush1.msra.mxu0 0.0
  %177 = vmatprep.subr.mxu0 0.0
  %178 = vmatpush1.msra.mxu0 0.0
  %179 = vmatprep.subr.mxu0 0.0
  %180 = vmatpush1.msra.mxu0 0.0
  %181 = vmatprep.subr.mxu0 0.0
  %182 = vmatpush1.msra.mxu0 0.0
  %183 = vmatprep.subr.mxu0 0.0
  %184 = vmatpush1.msra.mxu0 0.0
  %185 = vmatprep.subr.mxu0 0.0
  %186 = vmatpush1.msra.mxu0 0.0
  %187 = vmatprep.subr.mxu0 0.0
  %188 = vmatpush1.msra.mxu0 0.0
  %189 = vmatprep.subr.mxu0 0.0
  %190 = vmatpush1.msra.mxu0 0.0
  %191 = vmatprep.subr.mxu0 0.0
  %192 = vmatpush1.msra.mxu0 0.0
  %193 = vmatprep.subr.mxu0 0.0
  %194 = vmatpush1.msra.mxu0 0.0
  %195 = vmatprep.subr.mxu0 0.0
  %196 = vmatpush1.msra.mxu0 0.0
  %197 = vmatprep.subr.mxu0 0.0
  %198 = vmatpush1.msra.mxu0 0.0
  %199 = vmatprep.subr.mxu0 0.0
  %200 = vmatpush1.msra.mxu0 0.0
  %201 = vmatprep.subr.mxu0 0.0
  %202 = vmatpush1.msra.mxu0 0.0
  %203 = vmatprep.mubr.f32.mxu0 0.0
  %204 = vmatmul.mubr.f32.gmra.mrb[0].mxu0 %v134
  %v205 = vpop.f32.mrb[0].mxu0
  %v206 = vadd.f32 %v130, %v205
  %v207 = vpop.f32.mrb[0].mxu0
  %208 = vmatprep.mubr.f32.mxu0 0.0
  %209 = vmatmul.mubr.f32.gmra.mrb[0].mxu0 %v137
  %v210 = vpop.f32.mrb[0].mxu0
  %v211 = vadd.f32 %v130, %v210
  %v212 = vpop.f32.mrb[0].mxu0
  %213 = vdwg.mxu0
  %v214 = vmax.f32 %v206, 0.0
  %v215 = vmax.f32 %v211, 0.0
  %v216 = vld [vmem:[%s5] sm:$0xff]
  %v217 = vld [vmem:[%s5 + $0x8] sm:$0xff]
  %v218 = vld [vmem:[%s6] sm:$0x1]
  %v220 = vlaneseq
  %v221 = vshrl.u32 %v220, 7
  %v222 = vsub.s32 0, %v221
  %v223 = vrot.slane %v218, %v222
  %v226 = vsel %vm132, %v214, 0
  %v229 = vsel %vm132, %v215, 0
  %231 = vmatprep.subr.mxu0 0.0
  %232 = vmatpush1.msra.mxu0 %v216
  %233 = vmatprep.subr.mxu0 0.0
  %234 = vmatpush1.msra.mxu0 %v217
  %235 = vmatprep.subr.mxu0 0.0
  %236 = vmatpush1.msra.mxu0 0.0
  %237 = vmatprep.subr.mxu0 0.0
  %238 = vmatpush1.msra.mxu0 0.0
  %239 = vmatprep.subr.mxu0 0.0
  %240 = vmatpush1.msra.mxu0 0.0
  %241 = vmatprep.subr.mxu0 0.0
  %242 = vmatpush1.msra.mxu0 0.0
  %243 = vmatprep.subr.mxu0 0.0
  %244 = vmatpush1.msra.mxu0 0.0
  %245 = vmatprep.subr.mxu0 0.0
  %246 = vmatpush1.msra.mxu0 0.0
  %247 = vmatprep.subr.mxu0 0.0
  %248 = vmatpush1.msra.mxu0 0.0
  %249 = vmatprep.subr.mxu0 0.0
  %250 = vmatpush1.msra.mxu0 0.0
  %251 = vmatprep.subr.mxu0 0.0
  %252 = vmatpush1.msra.mxu0 0.0
  %253 = vmatprep.subr.mxu0 0.0
  %254 = vmatpush1.msra.mxu0 0.0
  %255 = vmatprep.subr.mxu0 0.0
  %256 = vmatpush1.msra.mxu0 0.0
  %257 = vmatprep.subr.mxu0 0.0
  %258 = vmatpush1.msra.mxu0 0.0
  %259 = vmatprep.subr.mxu0 0.0
  %260 = vmatpush1.msra.mxu0 0.0
  %261 = vmatprep.subr.mxu0 0.0
  %262 = vmatpush1.msra.mxu0 0.0
  %263 = vmatprep.subr.mxu0 0.0
  %264 = vmatpush1.msra.mxu0 0.0
  %265 = vmatprep.subr.mxu0 0.0
  %266 = vmatpush1.msra.mxu0 0.0
  %267 = vmatprep.subr.mxu0 0.0
  %268 = vmatpush1.msra.mxu0 0.0
  %269 = vmatprep.subr.mxu0 0.0
  %270 = vmatpush1.msra.mxu0 0.0
  %271 = vmatprep.subr.mxu0 0.0
  %272 = vmatpush1.msra.mxu0 0.0
  %273 = vmatprep.subr.mxu0 0.0
  %274 = vmatpush1.msra.mxu0 0.0
  %275 = vmatprep.subr.mxu0 0.0
  %276 = vmatpush1.msra.mxu0 0.0
  %277 = vmatprep.subr.mxu0 0.0
  %278 = vmatpush1.msra.mxu0 0.0
  %279 = vmatprep.subr.mxu0 0.0
  %280 = vmatpush1.msra.mxu0 0.0
  %281 = vmatprep.subr.mxu0 0.0
  %282 = vmatpush1.msra.mxu0 0.0
  %283 = vmatprep.subr.mxu0 0.0
  %284 = vmatpush1.msra.mxu0 0.0
  %285 = vmatprep.subr.mxu0 0.0
  %286 = vmatpush1.msra.mxu0 0.0
  %287 = vmatprep.subr.mxu0 0.0
  %288 = vmatpush1.msra.mxu0 0.0
  %289 = vmatprep.subr.mxu0 0.0
  %290 = vmatpush1.msra.mxu0 0.0
  %291 = vmatprep.subr.mxu0 0.0
  %292 = vmatpush1.msra.mxu0 0.0
  %293 = vmatprep.subr.mxu0 0.0
  %294 = vmatpush1.msra.mxu0 0.0
  %295 = vmatprep.mubr.f32.mxu0 0.0
  %296 = vmatmul.mubr.f32.gmra.mrb[0].mxu0 %v226
  %v297 = vpop.f32.mrb[0].mxu0
  %v298 = vadd.f32 %v223, %v297
  %v299 = vpop.f32.mrb[0].mxu0
  %300 = vmatprep.mubr.f32.mxu0 0.0
  %301 = vmatmul.mubr.f32.gmra.mrb[0].mxu0 %v229
  %v302 = vpop.f32.mrb[0].mxu0
  %v303 = vadd.f32 %v223, %v302
  %v304 = vpop.f32.mrb[0].mxu0
  %305 = vdwg.mxu0
  %306 = vst [vmem:[%s7] sm:$0xff] %v298
  %307 = vst [vmem:[%s7 + $0x8] sm:$0xff] %v303
  // Predicated region
  $region30: #{net_forward.1} parent=0 // pred_check
    _
  $region31: #{net_forward.1} parent=0 // pred_check_branch
    %309 = sbr.rel (0) target = $region33
  $region32: #{net_forward.1} parent=0 // pred_region
    _
  $region33: #{net_forward.1} parent=0 // pred_fallthru
    _
  // Predicated region
  $region34: #{net_forward.1} parent=0 // pred_check
    _
  $region35: #{net_forward.1} parent=0 // pred_check_branch
    %311 = sbr.rel (0) target = $region37
  $region36: #{net_forward.1} parent=0 // pred_region
    _
  $region37: #{net_forward.1} parent=0 // pred_fallthru
    _

</llo_original>
